<compile_context>
chip_gen: v7x
topology: tpu7x:2x2x1
jax: 0.10.0
libtpu: 0.0.40
codegen_flags: <defaults>
</compile_context>

<pallas_src>
import jax
import jax.numpy as jnp
from jax.experimental import pallas as pl
from jax.experimental.pallas import tpu as pltpu


def _round_up(x, m):
    return (x + m - 1) // m * m


def _head_kernel(x_ref, w1_ref, b1_ref, w2_ref, b2_ref, o_ref, acc_ref):
    k = pl.program_id(1)

    @pl.when(k == 0)
    def _init():
        acc_ref[...] = jnp.zeros_like(acc_ref)

    # dense: accumulate this K-chunk on the MXU (bf16 operands, f32 accumulate).
    x_bf = x_ref[...].astype(jnp.bfloat16)
    acc_ref[...] += jnp.dot(x_bf, w1_ref[...], preferred_element_type=jnp.float32)

    @pl.when(k == pl.num_programs(1) - 1)
    def _finalize():
        h = jnp.tanh(acc_ref[...] + b1_ref[...])                    # f32 bias + tanh
        logits = jnp.dot(h.astype(jnp.bfloat16), w2_ref[...],
                         preferred_element_type=jnp.float32) + b2_ref[...]
        o_ref[...] = logits.astype(o_ref.dtype)


def roberta_classification_head(features, w_dense, b_dense, w_out, b_out):
    """features: [B, S, H]. Weights stored [in, out]. Returns f32 logits [B, n_out]."""
    B, S, H = features.shape
    n_out = w_out.shape[1]

    # ---- padded / tiled geometry -------------------------------------------
    H_pad = _round_up(H, 128)
    N_pad = _round_up(n_out, 128)
    if B <= 128:
        B_pad = _round_up(B, 8)
        tile_b = B_pad
    else:
        B_pad = _round_up(B, 128)
        tile_b = 128
    tk = 256 if H_pad % 256 == 0 else 128
    n_bt, n_kt = B_pad // tile_b, H_pad // tk

    # ---- wrapper-side packing ------------------------------------------------
    f32 = jnp.float32
    if B_pad == B and H_pad == H:
        # Aligned: flatten (free contiguous view).  CLS token = first H columns,
        # which is exactly what the x BlockSpec reads -> no wrapper HBM copy.
        x = features.reshape(B, S * H)
    else:
        # Unaligned: slice only the [B, H] CLS slab, then pad that small 2-D array.
        x = jnp.pad(features[:, 0, :], ((0, B_pad - B), (0, H_pad - H)))

    w1 = jnp.pad(w_dense.astype(f32), ((0, H_pad - H), (0, H_pad - H))).astype(jnp.bfloat16)
    b1 = jnp.pad(b_dense.astype(f32), (0, H_pad - H)).reshape(1, H_pad)
    w2 = jnp.pad(w_out.astype(f32), ((0, H_pad - H), (0, N_pad - n_out))).astype(jnp.bfloat16)
    b2 = jnp.pad(b_out.astype(f32), (0, N_pad - n_out)).reshape(1, N_pad)

    x_bytes = jnp.dtype(x.dtype).itemsize
    cost = pl.CostEstimate(
        flops=2 * B_pad * H_pad * (H_pad + N_pad),
        transcendentals=B_pad * H_pad,
        bytes_accessed=(x_bytes * B_pad * H_pad + 2 * H_pad * H_pad + 4 * H_pad
                        + 2 * H_pad * N_pad + 4 * N_pad + 4 * B_pad * N_pad),
    )

    out = pl.pallas_call(
        _head_kernel,
        out_shape=jax.ShapeDtypeStruct((B_pad, N_pad), f32),
        grid_spec=pltpu.PrefetchScalarGridSpec(
            num_scalar_prefetch=0,
            grid=(n_bt, n_kt),
            in_specs=[
                pl.BlockSpec((tile_b, tk), lambda i, k: (i, k)),     # CLS rows, K chunk
                pl.BlockSpec((tk, H_pad), lambda i, k: (k, 0)),      # w_dense K chunk
                pl.BlockSpec((1, H_pad), lambda i, k: (0, 0)),       # b_dense (resident)
                pl.BlockSpec((H_pad, N_pad), lambda i, k: (0, 0)),   # w_out   (resident)
                pl.BlockSpec((1, N_pad), lambda i, k: (0, 0)),       # b_out   (resident)
            ],
            out_specs=pl.BlockSpec((tile_b, N_pad), lambda i, k: (i, 0)),
            scratch_shapes=[pltpu.VMEM((tile_b, H_pad), jnp.float32)],
        ),
        compiler_params=pltpu.CompilerParams(
            dimension_semantics=("parallel", "arbitrary")),
        cost_estimate=cost,
    )(x, w1, b1, w2, b2)

    return out[:B, :n_out]


def _reference(features, w_dense, b_dense, w_out, b_out):
    x = features[:, 0, :]
    h = jnp.tanh(x @ w_dense + b_dense)
    return h @ w_out + b_out


def _run_case(key, B, S, H, NL):
    k_f, k_w1, k_b1, k_w2, k_b2 = jax.random.split(key, 5)
    features = jax.random.normal(k_f, (B, S, H), dtype=jnp.float32)
    # Parameters stored [in, out] (transpose of PyTorch Linear.weight).
    w_dense = jax.random.normal(k_w1, (H, H), dtype=jnp.float32) * 0.02
    b_dense = jax.random.normal(k_b1, (H,), dtype=jnp.float32) * 0.02
    w_out = jax.random.normal(k_w2, (H, NL), dtype=jnp.float32) * 0.02
    b_out = jax.random.normal(k_b2, (NL,), dtype=jnp.float32) * 0.02

    logits = roberta_classification_head(features, w_dense, b_dense, w_out, b_out)
    jax.block_until_ready(logits)

    ref = _reference(features, w_dense, b_dense, w_out, b_out)
    assert logits.shape == (B, NL)
    # bf16 MXU operands -> bf16-level tolerance vs the pure-f32 reference.
    assert jnp.allclose(logits, ref, atol=2e-2, rtol=2e-2), (
        jnp.max(jnp.abs(logits - ref)))


if __name__ == "__main__":
    key = jax.random.PRNGKey(0)
    k0, k1, k2 = jax.random.split(key, 3)

    # Small, forward-consistent shapes: batch=2, seq=8, hidden=32, num_labels=2
    # (unaligned -> CLS-slice + pad path).
    _run_case(k0, B=2, S=8, H=32, NL=2)
    # Aligned path (zero wrapper copies) + K-accumulation grid (two K chunks).
    _run_case(k1, B=16, S=4, H=512, NL=2)
    # Unaligned hidden dim with multiple K chunks and batch padding.
    _run_case(k2, B=5, S=6, H=300, NL=2)

    print("KERNEL_OK")
</pallas_src>

<mosaic_0001>
module attributes {stable_mosaic.version = 11 : i64} {
  func.func @_head_kernel(%arg0: i32, %arg1: i32, %arg2: memref<8x128xf32, #tpu.memory_space<vmem>>, %arg3: memref<128x128xbf16, #tpu.memory_space<vmem>>, %arg4: memref<1x128xf32, #tpu.memory_space<vmem>>, %arg5: memref<128x128xbf16, #tpu.memory_space<vmem>>, %arg6: memref<1x128xf32, #tpu.memory_space<vmem>>, %arg7: memref<8x128xf32, #tpu.memory_space<vmem>>, %arg8: memref<8x128xf32, #tpu.memory_space<vmem>>) attributes {dimension_semantics = [#tpu.dimension_semantics<parallel>, #tpu.dimension_semantics<arbitrary>], iteration_bounds = array<i64: 1, 1>, scalar_prefetch = 0 : i64, scratch_operands = 1 : i64, tpu.core_type = #tpu.core_type<tc>, window_params = [{transform_indices = @transform_0, window_bounds = array<i64: 8, 128>}, {transform_indices = @transform_1, window_bounds = array<i64: 128, 128>}, {pipeline_mode = #tpu.pipeline_mode<synchronous>, transform_indices = @transform_2, window_bounds = array<i64: 1, 128>}, {pipeline_mode = #tpu.pipeline_mode<synchronous>, transform_indices = @transform_3, window_bounds = array<i64: 128, 128>}, {pipeline_mode = #tpu.pipeline_mode<synchronous>, transform_indices = @transform_4, window_bounds = array<i64: 1, 128>}, {transform_indices = @transform_5, window_bounds = array<i64: 8, 128>}]} {
    %c0_i32 = arith.constant 0 : i32
    %0 = arith.cmpi eq, %arg1, %c0_i32 : i32
    %1 = arith.extui %0 : i1 to i32
    %c0_i32_0 = arith.constant 0 : i32
    %2 = arith.cmpi ne, %1, %c0_i32_0 : i32
    scf.if %2 {
      %cst_10 = arith.constant 0.000000e+00 : f32
      %13 = vector.broadcast %cst_10 : f32 to vector<8x128xf32>
      %c0_11 = arith.constant 0 : index
      %c0_12 = arith.constant 0 : index
      %14 = vector.load %arg8[%c0_11, %c0_12] : memref<8x128xf32, #tpu.memory_space<vmem>>, vector<8x128xf32>
      tpu.vector_store %arg8[%c0_11, %c0_12], %13 {strides = array<i32>} : memref<8x128xf32, #tpu.memory_space<vmem>>, vector<8x128xf32>,
    } else {
    }
    %c0 = arith.constant 0 : index
    %c0_1 = arith.constant 0 : index
    %3 = vector.load %arg2[%c0, %c0_1] : memref<8x128xf32, #tpu.memory_space<vmem>>, vector<8x128xf32>
    %4 = arith.truncf %3 : vector<8x128xf32> to vector<8x128xbf16>
    %c0_2 = arith.constant 0 : index
    %c0_3 = arith.constant 0 : index
    %5 = vector.load %arg8[%c0_2, %c0_3] : memref<8x128xf32, #tpu.memory_space<vmem>>, vector<8x128xf32>
    %c0_4 = arith.constant 0 : index
    %c0_5 = arith.constant 0 : index
    %6 = vector.load %arg3[%c0_4, %c0_5] : memref<128x128xbf16, #tpu.memory_space<vmem>>, vector<128x128xbf16>
    %cst = arith.constant dense<0.000000e+00> : vector<8x128xf32>
    %7 = tpu.matmul %4, %6, %cst {dimension_numbers = #tpu.dot_dimension_numbers<[1], [0], [0], [1], [0, 0, 1, 1], [], []>} : vector<8x128xbf16>, vector<128x128xbf16>, vector<8x128xf32> -> vector<8x128xf32>
    %8 = arith.addf %5, %7 : vector<8x128xf32>
    %c0_6 = arith.constant 0 : index
    %c0_7 = arith.constant 0 : index
    %9 = vector.load %arg8[%c0_6, %c0_7] : memref<8x128xf32, #tpu.memory_space<vmem>>, vector<8x128xf32>
    tpu.vector_store %arg8[%c0_6, %c0_7], %8 {strides = array<i32>} : memref<8x128xf32, #tpu.memory_space<vmem>>, vector<8x128xf32>,
    %c0_i32_8 = arith.constant 0 : i32
    %10 = arith.cmpi eq, %arg1, %c0_i32_8 : i32
    %11 = arith.extui %10 : i1 to i32
    %c0_i32_9 = arith.constant 0 : i32
    %12 = arith.cmpi ne, %11, %c0_i32_9 : i32
    scf.if %12 {
      %c0_10 = arith.constant 0 : index
      %c0_11 = arith.constant 0 : index
      %13 = vector.load %arg8[%c0_10, %c0_11] : memref<8x128xf32, #tpu.memory_space<vmem>>, vector<8x128xf32>
      %c0_12 = arith.constant 0 : index
      %c0_13 = arith.constant 0 : index
      %14 = vector.load %arg4[%c0_12, %c0_13] : memref<1x128xf32, #tpu.memory_space<vmem>>, vector<1x128xf32>
      %15 = vector.broadcast %14 : vector<1x128xf32> to vector<8x128xf32>
      %16 = arith.addf %13, %15 : vector<8x128xf32>
      %17 = math.tanh %16 : vector<8x128xf32>
      %18 = arith.truncf %17 : vector<8x128xf32> to vector<8x128xbf16>
      %c0_14 = arith.constant 0 : index
      %c0_15 = arith.constant 0 : index
      %19 = vector.load %arg5[%c0_14, %c0_15] : memref<128x128xbf16, #tpu.memory_space<vmem>>, vector<128x128xbf16>
      %cst_16 = arith.constant dense<0.000000e+00> : vector<8x128xf32>
      %20 = tpu.matmul %18, %19, %cst_16 {dimension_numbers = #tpu.dot_dimension_numbers<[1], [0], [0], [1], [0, 0, 1, 1], [], []>} : vector<8x128xbf16>, vector<128x128xbf16>, vector<8x128xf32> -> vector<8x128xf32>
      %c0_17 = arith.constant 0 : index
      %c0_18 = arith.constant 0 : index
      %21 = vector.load %arg6[%c0_17, %c0_18] : memref<1x128xf32, #tpu.memory_space<vmem>>, vector<1x128xf32>
      %22 = vector.broadcast %21 : vector<1x128xf32> to vector<8x128xf32>
      %23 = arith.addf %20, %22 : vector<8x128xf32>
      %c0_19 = arith.constant 0 : index
      %c0_20 = arith.constant 0 : index
      %24 = vector.load %arg7[%c0_19, %c0_20] : memref<8x128xf32, #tpu.memory_space<vmem>>, vector<8x128xf32>
      tpu.vector_store %arg7[%c0_19, %c0_20], %23 {strides = array<i32>} : memref<8x128xf32, #tpu.memory_space<vmem>>, vector<8x128xf32>,
    } else {
    }
    return
  }
  func.func @transform_0(%arg0: i32, %arg1: i32) -> (i32, i32) {
    %c0_i32 = arith.constant 0 : i32
    return %arg0, %arg1 : i32, i32
  }
  func.func @transform_1(%arg0: i32, %arg1: i32) -> (i32, i32) {
    %c0_i32 = arith.constant 0 : i32
    %c0_i32_0 = arith.constant 0 : i32
    return %arg1, %c0_i32 : i32, i32
  }
  func.func @transform_2(%arg0: i32, %arg1: i32) -> (i32, i32) {
    %c0_i32 = arith.constant 0 : i32
    %c0_i32_0 = arith.constant 0 : i32
    %c0_i32_1 = arith.constant 0 : i32
    return %c0_i32, %c0_i32_0 : i32, i32
  }
  func.func @transform_3(%arg0: i32, %arg1: i32) -> (i32, i32) {
    %c0_i32 = arith.constant 0 : i32
    %c0_i32_0 = arith.constant 0 : i32
    %c0_i32_1 = arith.constant 0 : i32
    return %c0_i32, %c0_i32_0 : i32, i32
  }
  func.func @transform_4(%arg0: i32, %arg1: i32) -> (i32, i32) {
    %c0_i32 = arith.constant 0 : i32
    %c0_i32_0 = arith.constant 0 : i32
    %c0_i32_1 = arith.constant 0 : i32
    return %c0_i32, %c0_i32_0 : i32, i32
  }
  func.func @transform_5(%arg0: i32, %arg1: i32) -> (i32, i32) {
    %c0_i32 = arith.constant 0 : i32
    %c0_i32_0 = arith.constant 0 : i32
    return %arg0, %c0_i32 : i32, i32
  }
}

</mosaic_0001>

<llo_original>
// kernel: tpu_custom_call.1
$region0: #{tpu_custom_call.1}
  #allocation0 [shape = 'u32[]', space=smem, size = 0x4, offset = 0x4, fixed_abs, tag = 'smem constant byte address 0x4 - core index']
  #allocation1 [shape = 'u32[144,128]{1,0:T(1,128)}', space=vmem, size = 0x12000, scoped, tag = 'internal scratch']
  #allocation2 [shape = 'f32[8,128]{1,0:T(8,128)}', space=vmem, size = 0x1000, scoped, tag = 'scratch operand']
  %s0 = inlined_call_operand.hbm [shape: f32[8,128], index: 0, kind: input, shape index: {}]
  %s1 = inlined_call_operand.hbm [shape: bf16[128,128], index: 1, kind: input, shape index: {}]
  %s2 = inlined_call_operand.vmem [shape: f32[1,128], index: 2, kind: input, shape index: {}]
  %s3 = inlined_call_operand.hbm [shape: bf16[128,128], index: 3, kind: input, shape index: {}]
  %s4 = inlined_call_operand.vmem [shape: f32[1,128], index: 4, kind: input, shape index: {}]
  %s5 = inlined_call_operand.hbm [shape: f32[8,128], index: 5, kind: output, shape index: {}]
  %s6 = sld [smem:[#allocation0]]
  $region50: #{tpu_custom_call.1} parent=0
    _
  %s8 = ssub.s32 1, %s6
  %s9 = scalar_select 0, %s8, %s6
  $region1: #{tpu_custom_call.1} parent=0
    #allocation3 [shape = 'u8[4096]{0}', space=vmem, size = 0x1000, scoped, tag = 'input window, operand 0, single buffered']
    #allocation4 [shape = 's32[1]{0}', space=sflag, size = 0x4, scoped, tag = 'scoped memory for tpu_custom_call.1']
    #allocation5 [shape = 's32[1]{0}', space=sflag, size = 0x4, scoped, tag = 'scoped memory for tpu_custom_call.1']
    #allocation6 [shape = 'u8[32768]{0}', space=vmem, size = 0x8000, scoped, tag = 'input window, operand 1, single buffered']
    #allocation7 [shape = 's32[1]{0}', space=sflag, size = 0x4, scoped, tag = 'scoped memory for tpu_custom_call.1']
    #allocation8 [shape = 'u8[32768]{0}', space=vmem, size = 0x8000, scoped, tag = 'input window, operand 3, single buffered']
    #allocation9 [shape = 'u8[4096]{0}', space=vmem, size = 0x1000, scoped, tag = 'output window, operand 0, single buffered']
    %10 = vsyncpa [#allocation4], 0
    %11 = vsyncpa [#allocation7], 0
    %12 = vsyncpa [#allocation5], 0
    // Predicated region
    $region2: #{tpu_custom_call.1} parent=1 // pred_check
      _
    $region3: #{tpu_custom_call.1} parent=1 // pred_check_branch
      %14 = sbr.rel (0) target = $region5
    $region4: #{tpu_custom_call.1} parent=1 // pred_region
      %s16 = ssub.s32 128, 128
      %17 = vsyncadd [#allocation4], %s16
      %s19 = sshll.u32 [#allocation3], 4
      %s20 = int_to_ptr.vmem [resolvable:$true] %s19
      %22 = dma.hbm_to_vmem [thread:$0]  %s0, 128, %s20, [#allocation4]
    $region5: #{tpu_custom_call.1} parent=1 // pred_fallthru
      _
    // Predicated region
    $region6: #{tpu_custom_call.1} parent=1 // pred_check
      _
    $region7: #{tpu_custom_call.1} parent=1 // pred_check_branch
      %24 = sbr.rel (0) target = $region9
    $region8: #{tpu_custom_call.1} parent=1 // pred_region
      %s26 = ssub.s32 1024, 1024
      %27 = vsyncadd [#allocation7], %s26
      %s28 = sshll.u32 [#allocation6], 4
      %s29 = int_to_ptr.vmem [resolvable:$true] %s28
      %34 = dma.hbm_to_vmem [thread:$0]  %s1, 1024, %s29, [#allocation7], 64, 64, 4
    $region9: #{tpu_custom_call.1} parent=1 // pred_fallthru
      _
    // Predicated region
    $region10: #{tpu_custom_call.1} parent=1 // pred_check
      _
    $region11: #{tpu_custom_call.1} parent=1 // pred_check_branch
      %36 = sbr.rel (0) target = $region13
    $region12: #{tpu_custom_call.1} parent=1 // pred_region
      _
    $region13: #{tpu_custom_call.1} parent=1 // pred_fallthru
      _
    // Predicated region
    $region14: #{tpu_custom_call.1} parent=1 // pred_check
      _
    $region15: #{tpu_custom_call.1} parent=1 // pred_check_branch
      %38 = sbr.rel (0) target = $region17
    $region16: #{tpu_custom_call.1} parent=1 // pred_region
      %s40 = ssub.s32 1024, 1024
      %41 = vsyncadd [#allocation7], %s40
      %s42 = sshll.u32 [#allocation8], 4
      %s43 = int_to_ptr.vmem [resolvable:$true] %s42
      %48 = dma.hbm_to_vmem [thread:$0]  %s3, 1024, %s43, [#allocation7], 64, 64, 4
    $region17: #{tpu_custom_call.1} parent=1 // pred_fallthru
      _
    // Predicated region
    $region18: #{tpu_custom_call.1} parent=1 // pred_check
      _
    $region19: #{tpu_custom_call.1} parent=1 // pred_check_branch
      %50 = sbr.rel (0) target = $region21
    $region20: #{tpu_custom_call.1} parent=1 // pred_region
      _
    $region21: #{tpu_custom_call.1} parent=1 // pred_fallthru
      _
    // Predicated region
    $region22: #{tpu_custom_call.1} parent=1 // pred_check
      _
    $region23: #{tpu_custom_call.1} parent=1 // pred_check_branch
      %52 = sbr.rel (0) target = $region25
    $region24: #{tpu_custom_call.1} parent=1 // pred_region
      %53 = dma.done [#allocation4], 128
    $region25: #{tpu_custom_call.1} parent=1 // pred_fallthru
      _
    // Predicated region
    $region26: #{tpu_custom_call.1} parent=1 // pred_check
      _
    $region27: #{tpu_custom_call.1} parent=1 // pred_check_branch
      %55 = sbr.rel (0) target = $region29
    $region28: #{tpu_custom_call.1} parent=1 // pred_region
      %56 = dma.done [#allocation7], 1024
    $region29: #{tpu_custom_call.1} parent=1 // pred_fallthru
      _
    // Predicated region
    $region30: #{tpu_custom_call.1} parent=1 // pred_check
      _
    $region31: #{tpu_custom_call.1} parent=1 // pred_check_branch
      %58 = sbr.rel (0) target = $region33
    $region32: #{tpu_custom_call.1} parent=1 // pred_region
      %59 = dma.done [#allocation7], 1024
    $region33: #{tpu_custom_call.1} parent=1 // pred_fallthru
      _
    %p61 = scmp.eq.s32.totalorder 0, 0
    // Predicated region
    $region34: #{tpu_custom_call.1} parent=1 // pred_check
      %p62 = pneg %p61
    $region35: #{tpu_custom_call.1} parent=1 // pred_check_branch
      %64 = sbr.rel (%p62) target = $region37
    $region36: #{tpu_custom_call.1} parent=1 // pred_region
      %65 = vst [vmem:[#allocation2] sm:$0xff] 0.0
    $region37: #{tpu_custom_call.1} parent=1 // pred_fallthru
      _
    %v66 = vld [vmem:[#allocation3] sm:$0xff]
    %v67 = vpack.c.bf16 %v66, %v66
    %v68 = vld [vmem:[#allocation2] sm:$0xff]
    %v69 = vld [vmem:[#allocation6] sm:$0xf]
    %v70 = vld [vmem:[#allocation6 + $0x4] sm:$0xf]
    %v71 = vld [vmem:[#allocation6 + $0x8] sm:$0xf]
    %v72 = vld [vmem:[#allocation6 + $0xc] sm:$0xf]
    %v73 = vld [vmem:[#allocation6 + $0x10] sm:$0xf]
    %v74 = vld [vmem:[#allocation6 + $0x14] sm:$0xf]
    %v75 = vld [vmem:[#allocation6 + $0x18] sm:$0xf]
    %v76 = vld [vmem:[#allocation6 + $0x1c] sm:$0xf]
    %v77 = vld [vmem:[#allocation6 + $0x20] sm:$0xf]
    %v78 = vld [vmem:[#allocation6 + $0x24] sm:$0xf]
    %v79 = vld [vmem:[#allocation6 + $0x28] sm:$0xf]
    %v80 = vld [vmem:[#allocation6 + $0x2c] sm:$0xf]
    %v81 = vld [vmem:[#allocation6 + $0x30] sm:$0xf]
    %v82 = vld [vmem:[#allocation6 + $0x34] sm:$0xf]
    %v83 = vld [vmem:[#allocation6 + $0x38] sm:$0xf]
    %v84 = vld [vmem:[#allocation6 + $0x3c] sm:$0xf]
    %v101 = vunpack.c.l.b16 %v69
    %v102 = vunpack.c.l.b16 %v70
    %v103 = vunpack.c.l.b16 %v71
    %v104 = vunpack.c.l.b16 %v72
    %v105 = vunpack.c.l.b16 %v73
    %v106 = vunpack.c.l.b16 %v74
    %v107 = vunpack.c.l.b16 %v75
    %v108 = vunpack.c.l.b16 %v76
    %v109 = vunpack.c.l.b16 %v77
    %v110 = vunpack.c.l.b16 %v78
    %v111 = vunpack.c.l.b16 %v79
    %v112 = vunpack.c.l.b16 %v80
    %v113 = vunpack.c.l.b16 %v81
    %v114 = vunpack.c.l.b16 %v82
    %v115 = vunpack.c.l.b16 %v83
    %v116 = vunpack.c.l.b16 %v84
    %v117 = vpack.c.b16 %v102, %v101
    %v118 = vpack.c.b16 %v104, %v103
    %v119 = vpack.c.b16 %v106, %v105
    %v120 = vpack.c.b16 %v108, %v107
    %v121 = vpack.c.b16 %v110, %v109
    %v122 = vpack.c.b16 %v112, %v111
    %v123 = vpack.c.b16 %v114, %v113
    %v124 = vpack.c.b16 %v116, %v115
    %133 = vmatprep.subr.bf16.mxu0 0
    %134 = vmatpush1.bf16.msra.mxu0 %v117
    %135 = vmatprep.subr.bf16.mxu0 0
    %136 = vmatpush1.bf16.msra.mxu0 %v118
    %137 = vmatprep.subr.bf16.mxu0 0
    %138 = vmatpush1.bf16.msra.mxu0 %v119
    %139 = vmatprep.subr.bf16.mxu0 0
    %140 = vmatpush1.bf16.msra.mxu0 %v120
    %141 = vmatprep.subr.bf16.mxu0 0
    %142 = vmatpush1.bf16.msra.mxu0 %v121
    %143 = vmatprep.subr.bf16.mxu0 0
    %144 = vmatpush1.bf16.msra.mxu0 %v122
    %145 = vmatprep.subr.bf16.mxu0 0
    %146 = vmatpush1.bf16.msra.mxu0 %v123
    %147 = vmatprep.subr.bf16.mxu0 0
    %148 = vmatpush1.bf16.msra.mxu0 %v124
    %149 = vmatprep.subr.bf16.mxu0 0
    %150 = vmatpush1.bf16.msra.mxu0 0
    %151 = vmatprep.subr.bf16.mxu0 0
    %152 = vmatpush1.bf16.msra.mxu0 0
    %153 = vmatprep.subr.bf16.mxu0 0
    %154 = vmatpush1.bf16.msra.mxu0 0
    %155 = vmatprep.subr.bf16.mxu0 0
    %156 = vmatpush1.bf16.msra.mxu0 0
    %157 = vmatprep.subr.bf16.mxu0 0
    %158 = vmatpush1.bf16.msra.mxu0 0
    %159 = vmatprep.subr.bf16.mxu0 0
    %160 = vmatpush1.bf16.msra.mxu0 0
    %161 = vmatprep.subr.bf16.mxu0 0
    %162 = vmatpush1.bf16.msra.mxu0 0
    %163 = vmatprep.subr.bf16.mxu0 0
    %164 = vmatpush1.bf16.msra.mxu0 0
    %165 = vmatprep.mubr.bf16.mxu0 0
    %166 = vmatmul.mubr.bf16.gmra.mrb[0].mxu0 %v67
    %v167 = vpop.f32.mrb[0].mxu0
    %v168 = vadd.f32 0.0, %v167
    %v169 = vpop.f32.mrb[0].mxu0
    %v170 = vpop.f32.mrb[0].mxu0
    %v171 = vpop.f32.mrb[0].mxu0
    %172 = vdwg.mxu0
    %v173 = vadd.f32 %v68, %v168
    %174 = vst [vmem:[#allocation2] sm:$0xff] %v173
    // Predicated region
    $region38: #{tpu_custom_call.1} parent=1 // pred_check
      %p175 = pneg %p61
    $region39: #{tpu_custom_call.1} parent=1 // pred_check_branch
      %177 = sbr.rel (%p175) target = $region41
    $region40: #{tpu_custom_call.1} parent=1 // pred_region
      %v178 = vld [vmem:[#allocation2] sm:$0xff]
      %v179 = vld [vmem:[%s2] sm:$0x1]
      %v181 = vlaneseq
      %v182 = vshrl.u32 %v181, 7
      %v183 = vsub.s32 0, %v182
      %v184 = vrot.slane %v179, %v183
      %v186 = vadd.f32 %v178, %v184
      %v187 = vtanh.pop %v186
      %v188 = vpack.c.bf16 %v187, %v187
      %v189 = vld [vmem:[#allocation8] sm:$0xf]
      %v190 = vld [vmem:[#allocation8 + $0x4] sm:$0xf]
      %v191 = vld [vmem:[#allocation8 + $0x8] sm:$0xf]
      %v192 = vld [vmem:[#allocation8 + $0xc] sm:$0xf]
      %v193 = vld [vmem:[#allocation8 + $0x10] sm:$0xf]
      %v194 = vld [vmem:[#allocation8 + $0x14] sm:$0xf]
      %v195 = vld [vmem:[#allocation8 + $0x18] sm:$0xf]
      %v196 = vld [vmem:[#allocation8 + $0x1c] sm:$0xf]
      %v197 = vld [vmem:[#allocation8 + $0x20] sm:$0xf]
      %v198 = vld [vmem:[#allocation8 + $0x24] sm:$0xf]
      %v199 = vld [vmem:[#allocation8 + $0x28] sm:$0xf]
      %v200 = vld [vmem:[#allocation8 + $0x2c] sm:$0xf]
      %v201 = vld [vmem:[#allocation8 + $0x30] sm:$0xf]
      %v202 = vld [vmem:[#allocation8 + $0x34] sm:$0xf]
      %v203 = vld [vmem:[#allocation8 + $0x38] sm:$0xf]
      %v204 = vld [vmem:[#allocation8 + $0x3c] sm:$0xf]
      %v205 = vld [vmem:[%s4] sm:$0x1]
      %v207 = vlaneseq
      %v208 = vshrl.u32 %v207, 7
      %v209 = vsub.s32 0, %v208
      %v210 = vrot.slane %v205, %v209
      %v228 = vunpack.c.l.b16 %v189
      %v229 = vunpack.c.l.b16 %v190
      %v230 = vunpack.c.l.b16 %v191
      %v231 = vunpack.c.l.b16 %v192
      %v232 = vunpack.c.l.b16 %v193
      %v233 = vunpack.c.l.b16 %v194
      %v234 = vunpack.c.l.b16 %v195
      %v235 = vunpack.c.l.b16 %v196
      %v236 = vunpack.c.l.b16 %v197
      %v237 = vunpack.c.l.b16 %v198
      %v238 = vunpack.c.l.b16 %v199
      %v239 = vunpack.c.l.b16 %v200
      %v240 = vunpack.c.l.b16 %v201
      %v241 = vunpack.c.l.b16 %v202
      %v242 = vunpack.c.l.b16 %v203
      %v243 = vunpack.c.l.b16 %v204
      %v244 = vpack.c.b16 %v229, %v228
      %v245 = vpack.c.b16 %v231, %v230
      %v246 = vpack.c.b16 %v233, %v232
      %v247 = vpack.c.b16 %v235, %v234
      %v248 = vpack.c.b16 %v237, %v236
      %v249 = vpack.c.b16 %v239, %v238
      %v250 = vpack.c.b16 %v241, %v240
      %v251 = vpack.c.b16 %v243, %v242
      %260 = vmatprep.subr.bf16.mxu0 0
      %261 = vmatpush1.bf16.msra.mxu0 %v244
      %262 = vmatprep.subr.bf16.mxu0 0
      %263 = vmatpush1.bf16.msra.mxu0 %v245
      %264 = vmatprep.subr.bf16.mxu0 0
      %265 = vmatpush1.bf16.msra.mxu0 %v246
      %266 = vmatprep.subr.bf16.mxu0 0
      %267 = vmatpush1.bf16.msra.mxu0 %v247
      %268 = vmatprep.subr.bf16.mxu0 0
      %269 = vmatpush1.bf16.msra.mxu0 %v248
      %270 = vmatprep.subr.bf16.mxu0 0
      %271 = vmatpush1.bf16.msra.mxu0 %v249
      %272 = vmatprep.subr.bf16.mxu0 0
      %273 = vmatpush1.bf16.msra.mxu0 %v250
      %274 = vmatprep.subr.bf16.mxu0 0
      %275 = vmatpush1.bf16.msra.mxu0 %v251
      %276 = vmatprep.subr.bf16.mxu0 0
      %277 = vmatpush1.bf16.msra.mxu0 0
      %278 = vmatprep.subr.bf16.mxu0 0
      %279 = vmatpush1.bf16.msra.mxu0 0
      %280 = vmatprep.subr.bf16.mxu0 0
      %281 = vmatpush1.bf16.msra.mxu0 0
      %282 = vmatprep.subr.bf16.mxu0 0
      %283 = vmatpush1.bf16.msra.mxu0 0
      %284 = vmatprep.subr.bf16.mxu0 0
      %285 = vmatpush1.bf16.msra.mxu0 0
      %286 = vmatprep.subr.bf16.mxu0 0
      %287 = vmatpush1.bf16.msra.mxu0 0
      %288 = vmatprep.subr.bf16.mxu0 0
      %289 = vmatpush1.bf16.msra.mxu0 0
      %290 = vmatprep.subr.bf16.mxu0 0
      %291 = vmatpush1.bf16.msra.mxu0 0
      %292 = vmatprep.mubr.bf16.mxu0 0
      %293 = vmatmul.mubr.bf16.gmra.mrb[0].mxu0 %v188
      %v294 = vpop.f32.mrb[0].mxu0
      %v295 = vadd.f32 %v210, %v294
      %v296 = vpop.f32.mrb[0].mxu0
      %v297 = vpop.f32.mrb[0].mxu0
      %v298 = vpop.f32.mrb[0].mxu0
      %299 = vdwg.mxu0
      %300 = vst [vmem:[#allocation9] sm:$0xff] %v295
    $region41: #{tpu_custom_call.1} parent=1 // pred_fallthru
      _
    // Predicated region
    $region42: #{tpu_custom_call.1} parent=1 // pred_check
      _
    $region43: #{tpu_custom_call.1} parent=1 // pred_check_branch
      %302 = sbr.rel (0) target = $region45
    $region44: #{tpu_custom_call.1} parent=1 // pred_region
      %s304 = ssub.s32 128, 128
      %305 = vsyncadd [#allocation5], %s304
      %s307 = sshll.u32 [#allocation9], 4
      %s308 = int_to_ptr.vmem [resolvable:$true] %s307
      %310 = dma.vmem_to_hbm [thread:$0]  %s308, 128, %s5, [#allocation5]
    $region45: #{tpu_custom_call.1} parent=1 // pred_fallthru
      _
    // Predicated region
    $region46: #{tpu_custom_call.1} parent=1 // pred_check
      _
    $region47: #{tpu_custom_call.1} parent=1 // pred_check_branch
      %312 = sbr.rel (0) target = $region49
    $region48: #{tpu_custom_call.1} parent=1 // pred_region
      %313 = dma.done [#allocation5], 128
    $region49: #{tpu_custom_call.1} parent=1 // pred_fallthru
      _
    %314 = vsyncpa [#allocation4], 1
    %315 = vsyncpa [#allocation7], 1
    %316 = vsyncpa [#allocation5], 1

</llo_original>
